<compile_context>
chip_gen: v5e
topology: v5e:2x2
jax: 0.10.0
libtpu: 0.0.40
codegen_flags: <defaults>
</compile_context>

<pallas_src>
import functools

import jax
import jax.numpy as jnp
from jax.experimental import pallas as pl
from jax.experimental.pallas import tpu as pltpu


_LANES = 128
_TARGET_BLOCK_BYTES = 8 * 1024 * 1024  # per-step x block target (2-8 MiB sweet spot)


def _round_up(a, m):
    return (a + m - 1) // m * m


def _chunk_rows(x_bytes):
    # One native sublane tile worth of rows for the input dtype (8 for f32,
    # 16 for bf16, 32 for int8/fp8) so chunk slices never split a packed tile.
    return 8 * max(1, 4 // x_bytes)


def _vmem_capacity_bytes():
    try:
        cap = getattr(pltpu.get_tpu_info(), "vmem_capacity_bytes", None)
        if cap:
            return int(cap)
    except Exception:
        pass
    return 64 * 1024 * 1024  # conservative default (v7x-sized)


def _pick_s_tile(S, C, x_bytes, ch, vmem_budget, max_s_tile=None):
    """Rows (of 128 lanes) per grid step, sized from the VMEM budget."""
    row_x = C * _LANES * x_bytes          # one row of the x block
    row_y = _LANES * 4                    # one row of the int32 label block
    per_row = 2 * (row_x + row_y)         # double-buffered input blocks
    fixed = 2 * C * ch * _LANES * 4 + (4 << 20)  # scratch accumulators + slack
    s_vmem = max(ch, (vmem_budget - fixed) // per_row)
    s_target = max(ch, _TARGET_BLOCK_BYTES // row_x)
    s = min(S, s_vmem, s_target)
    if max_s_tile is not None:
        s = min(s, max_s_tile)
    if s < S:
        s = max(ch, (s // ch) * ch)       # tiled path: keep s a multiple of ch
        if s >= S:
            s = S
    return int(s)


def _soft_dice_kernel(x_ref, y_ref, dc_ref, tp_acc, sxy_acc, *,
                      smooth, rag_rows, chunk_rows):
    # x_ref  : (1, C, s_tile, 128)  probabilities (apply_nonlin=None)
    # y_ref  : (1, 1, s_tile, 128)  int32 label map (-1 == padding / no class)
    # dc_ref : (1, C, 1)            per-(batch, class) dice, written on last tile
    # *_acc  : (C, CH, 128) f32     VMEM scratch, touched once per grid step
    ch = chunk_rows
    C = x_ref.shape[1]
    s_tile = x_ref.shape[2]
    n_full = s_tile // ch
    rem = s_tile - n_full * ch        # nonzero only when s_tile == S (single tile)
    ragged = rag_rows < s_tile        # static: last tile contains garbage rows

    t = pl.program_id(1)
    nt = pl.num_programs(1)

    @pl.when(t == 0)
    def _init():
        tp_acc[...] = jnp.zeros_like(tp_acc)
        sxy_acc[...] = jnp.zeros_like(sxy_acc)

    cls = jax.lax.broadcasted_iota(jnp.int32, (C, ch, _LANES), 0)

    def chunk_update(i, carry, row_limit):
        tp, sxy = carry
        off = i * ch
        if not isinstance(off, int):
            off = pl.multiple_of(off, ch)
        x = x_ref[0, :, pl.ds(off, ch), :].astype(jnp.float32)   # (C, ch, 128)
        y = y_ref[0, :, pl.ds(off, ch), :]                       # (1, ch, 128)
        oh = y == cls                                            # (C, ch, 128)
        if row_limit is not None:
            row = off + jax.lax.broadcasted_iota(jnp.int32, (1, ch, _LANES), 1)
            valid = row < row_limit
            oh = jnp.logical_and(oh, valid)
            x = jnp.where(valid, x, 0.0)
        tp = tp + jnp.where(oh, x, 0.0)
        sxy = sxy + jnp.where(oh, x + 1.0, x)   # x + onehot
        return tp, sxy

    def accumulate(n_chunks, row_limit):
        zero = jnp.zeros((C, ch, _LANES), jnp.float32)
        carry = (zero, zero)
        if n_chunks == 1:
            carry = chunk_update(0, carry, row_limit)
        elif n_chunks > 1:
            unroll = 1
            for u in (8, 4, 2):
                if n_chunks % u == 0:
                    unroll = u
                    break
            carry = jax.lax.fori_loop(
                0, n_chunks,
                lambda i, c: chunk_update(i, c, row_limit),
                carry, unroll=unroll)
        tp, sxy = carry
        tp_acc[...] += tp
        sxy_acc[...] += sxy
        if rem:
            # Tail rows of a full-extent (s_tile == S) block; always valid data.
            off = n_full * ch
            x = x_ref[0, :, off:off + rem, :].astype(jnp.float32)
            y = y_ref[0, :, off:off + rem, :]
            oh = y == jax.lax.broadcasted_iota(jnp.int32, (C, rem, _LANES), 0)
            tp_acc[:, :rem, :] += jnp.where(oh, x, 0.0)
            sxy_acc[:, :rem, :] += jnp.where(oh, x + 1.0, x)

    if ragged:
        @pl.when(t != nt - 1)
        def _steady():
            accumulate(n_full, None)

        @pl.when(t == nt - 1)
        def _tail():
            accumulate(-(-rag_rows // ch), rag_rows)
    else:
        accumulate(n_full, None)

    @pl.when(t == nt - 1)
    def _epilogue():
        tp = jnp.sum(tp_acc[...], axis=1)                 # (C, 128)
        tp = jnp.sum(tp, axis=-1, keepdims=True)          # (C, 1)
        sxy = jnp.sum(sxy_acc[...], axis=1)
        sxy = jnp.sum(sxy, axis=-1, keepdims=True)
        # fp = sum(x) - tp, fn = sum(onehot) - tp  =>  2tp+fp+fn = sum(x+onehot)
        dc_ref[0] = (2.0 * tp + smooth) / (sxy + smooth)


def soft_dice_loss(x_nchw, y_labels, smooth=1.0, max_s_tile=None):
    """SoftDiceLoss.forward with default args.
    x_nchw: (B, C, H, W) probabilities; y_labels: (B, H, W) or (B, 1, H, W) ints."""
    B, C, H, W = x_nchw.shape
    if y_labels.ndim == 4:
        if y_labels.shape[1] != 1:
            # TODO(synk): one-hot ground truth (gt.shape == x.shape) not supported.
            raise NotImplementedError("one-hot ground truth not supported")
        y_labels = y_labels[:, 0]
    HW = H * W

    x_dtype = x_nchw.dtype
    if not jnp.issubdtype(x_dtype, jnp.floating):
        x_dtype = jnp.float32
    x3 = x_nchw.reshape(B, C, HW).astype(x_dtype)
    # TODO(synk): store labels as int8 (C <= 127) to cut label HBM traffic on v5e.
    y3 = y_labels.reshape(B, 1, HW).astype(jnp.int32)

    # Lane-dense view: (B, C, S, 128). Only a <=127-element alignment pad is
    # ever materialized; tile-granularity tails are masked in-kernel.
    hw_pad = _round_up(HW, _LANES)
    if hw_pad != HW:
        # TODO(synk): mask the lane tail in-kernel too, to avoid this HBM copy.
        x3 = jnp.pad(x3, ((0, 0), (0, 0), (0, hw_pad - HW)))
        y3 = jnp.pad(y3, ((0, 0), (0, 0), (0, hw_pad - HW)), constant_values=-1)
    S = hw_pad // _LANES
    x4 = x3.reshape(B, C, S, _LANES)
    y4 = y3.reshape(B, 1, S, _LANES)

    x_bytes = jnp.dtype(x_dtype).itemsize
    ch = _chunk_rows(x_bytes)
    vmem_budget = (_vmem_capacity_bytes() * 3) // 4  # ~48 MiB v7x, ~96 MiB v5e/v6e
    s_tile = _pick_s_tile(S, C, x_bytes, ch, vmem_budget, max_s_tile)
    num_tiles = pl.cdiv(S, s_tile)
    rag_rows = S - (num_tiles - 1) * s_tile

    kernel = functools.partial(
        _soft_dice_kernel, smooth=float(smooth), rag_rows=int(rag_rows),
        chunk_rows=ch)

    dc = pl.pallas_call(
        kernel,
        out_shape=jax.ShapeDtypeStruct((B, C, 1), jnp.float32),
        grid_spec=pltpu.PrefetchScalarGridSpec(
            num_scalar_prefetch=0,
            grid=(B, num_tiles),
            in_specs=[
                pl.BlockSpec((1, C, s_tile, _LANES), lambda b, t: (b, 0, t, 0)),
                pl.BlockSpec((1, 1, s_tile, _LANES), lambda b, t: (b, 0, t, 0)),
            ],
            out_specs=pl.BlockSpec((1, C, 1), lambda b, t: (b, 0, 0)),
            scratch_shapes=[
                pltpu.VMEM((C, ch, _LANES), jnp.float32),  # tp partials
                pltpu.VMEM((C, ch, _LANES), jnp.float32),  # sum(x + onehot) partials
            ],
        ),
        compiler_params=pltpu.CompilerParams(
            # TODO(synk): for B == 1 on v7x, also split the spatial axis across
            # cores (per-core partial sums combined in JAX) to use both TCs.
            dimension_semantics=("parallel", "arbitrary"),
            vmem_limit_bytes=int(vmem_budget),
        ),
    )(x4, y4)

    # batch_dice=False, do_bg=True -> mean over all (B, C) dice entries, negated.
    return -jnp.mean(dc)


def _reference_soft_dice(x_nchw, y_labels, smooth=1.0):
    # Pure-JAX reference mirroring the PyTorch forward (default args).
    B, C, H, W = x_nchw.shape
    xf = x_nchw.astype(jnp.float32)
    y_onehot = jax.nn.one_hot(y_labels.astype(jnp.int32), C, dtype=jnp.float32)
    y_onehot = jnp.transpose(y_onehot, (0, 3, 1, 2))  # (B, C, H, W)
    tp = jnp.sum(xf * y_onehot, axis=(2, 3))
    fp = jnp.sum(xf * (1.0 - y_onehot), axis=(2, 3))
    fn = jnp.sum((1.0 - xf) * y_onehot, axis=(2, 3))
    dc = (2.0 * tp + smooth) / (2.0 * tp + fp + fn + smooth)
    return -jnp.mean(dc)


if __name__ == "__main__":
    key = jax.random.PRNGKey(0)
    kx, ky, kx2, ky2 = jax.random.split(key, 4)

    # Case 1: module-default small shapes (exercises the tiny-S / full-extent path).
    B, C, H, W = 2, 4, 16, 16
    x = jax.nn.sigmoid(jax.random.normal(kx, (B, C, H, W), dtype=jnp.float32))
    y = jax.random.randint(ky, (B, H, W), 0, C, dtype=jnp.int32)
    loss = jax.block_until_ready(soft_dice_loss(x, y, smooth=1.0))
    ref = jax.block_until_ready(_reference_soft_dice(x, y, smooth=1.0))
    assert jnp.allclose(loss, ref, atol=1e-5, rtol=1e-5), (loss, ref)

    # Case 2: non-aligned spatial size + forced small tile to exercise the
    # multi-tile pipeline, the chunked fori_loop, and the ragged-tail masking.
    B2, C2, H2, W2 = 2, 3, 72, 72
    x2 = jax.nn.sigmoid(jax.random.normal(kx2, (B2, C2, H2, W2), dtype=jnp.float32))
    y2 = jax.random.randint(ky2, (B2, H2, W2), 0, C2, dtype=jnp.int32)
    loss2 = jax.block_until_ready(soft_dice_loss(x2, y2, smooth=1.0, max_s_tile=16))
    ref2 = jax.block_until_ready(_reference_soft_dice(x2, y2, smooth=1.0))
    assert jnp.allclose(loss2, ref2, atol=1e-5, rtol=1e-5), (loss2, ref2)

    # TODO(synk): loss_mask / batch_dice=True / do_bg=False variants not implemented
    # (module defaults only).
    print("KERNEL_OK")
</pallas_src>

<mosaic_0001>
module attributes {stable_mosaic.version = 11 : i64} {
  func.func @_soft_dice_kernel(%arg0: i32, %arg1: i32, %arg2: memref<1x4x2x128xf32, #tpu.memory_space<vmem>>, %arg3: memref<1x1x2x128xi32, #tpu.memory_space<vmem>>, %arg4: memref<1x4x1xf32, #tpu.memory_space<vmem>>, %arg5: memref<4x8x128xf32, #tpu.memory_space<vmem>>, %arg6: memref<4x8x128xf32, #tpu.memory_space<vmem>>) attributes {dimension_semantics = [#tpu.dimension_semantics<parallel>, #tpu.dimension_semantics<arbitrary>], iteration_bounds = array<i64: 2, 1>, scalar_prefetch = 0 : i64, scratch_operands = 2 : i64, tpu.core_type = #tpu.core_type<tc>, window_params = [{transform_indices = @transform_0, window_bounds = array<i64: 1, 4, 2, 128>}, {transform_indices = @transform_1, window_bounds = array<i64: 1, 1, 2, 128>}, {transform_indices = @transform_2, window_bounds = array<i64: 1, 4, 1>}]} {
    %c0_i32 = arith.constant 0 : i32
    %0 = arith.cmpi eq, %arg1, %c0_i32 : i32
    %1 = arith.extui %0 : i1 to i32
    %c0_i32_0 = arith.constant 0 : i32
    %2 = arith.cmpi ne, %1, %c0_i32_0 : i32
    scf.if %2 {
      %cst_36 = arith.constant 0.000000e+00 : f32
      %31 = vector.broadcast %cst_36 : f32 to vector<4x8x128xf32>
      %c0_37 = arith.constant 0 : index
      %c0_38 = arith.constant 0 : index
      %c0_39 = arith.constant 0 : index
      %32 = vector.load %arg5[%c0_37, %c0_38, %c0_39] : memref<4x8x128xf32, #tpu.memory_space<vmem>>, vector<4x8x128xf32>
      tpu.vector_store %arg5[%c0_37, %c0_38, %c0_39], %31 {strides = array<i32>} : memref<4x8x128xf32, #tpu.memory_space<vmem>>, vector<4x8x128xf32>,
      %cst_40 = arith.constant 0.000000e+00 : f32
      %33 = vector.broadcast %cst_40 : f32 to vector<4x8x128xf32>
      %c0_41 = arith.constant 0 : index
      %c0_42 = arith.constant 0 : index
      %c0_43 = arith.constant 0 : index
      %34 = vector.load %arg6[%c0_41, %c0_42, %c0_43] : memref<4x8x128xf32, #tpu.memory_space<vmem>>, vector<4x8x128xf32>
      tpu.vector_store %arg6[%c0_41, %c0_42, %c0_43], %33 {strides = array<i32>} : memref<4x8x128xf32, #tpu.memory_space<vmem>>, vector<4x8x128xf32>,
    } else {
    }
    %cst = arith.constant 0.000000e+00 : f32
    %3 = vector.broadcast %cst : f32 to vector<4x8x128xf32>
    %c0 = arith.constant 0 : index
    %c0_1 = arith.constant 0 : index
    %c0_2 = arith.constant 0 : index
    %4 = vector.load %arg5[%c0, %c0_1, %c0_2] : memref<4x8x128xf32, #tpu.memory_space<vmem>>, vector<4x8x128xf32>
    %5 = arith.addf %4, %3 : vector<4x8x128xf32>
    %c0_3 = arith.constant 0 : index
    %c0_4 = arith.constant 0 : index
    %c0_5 = arith.constant 0 : index
    %6 = vector.load %arg5[%c0_3, %c0_4, %c0_5] : memref<4x8x128xf32, #tpu.memory_space<vmem>>, vector<4x8x128xf32>
    tpu.vector_store %arg5[%c0_3, %c0_4, %c0_5], %5 {strides = array<i32>} : memref<4x8x128xf32, #tpu.memory_space<vmem>>, vector<4x8x128xf32>,
    %c0_6 = arith.constant 0 : index
    %c0_7 = arith.constant 0 : index
    %c0_8 = arith.constant 0 : index
    %7 = vector.load %arg6[%c0_6, %c0_7, %c0_8] : memref<4x8x128xf32, #tpu.memory_space<vmem>>, vector<4x8x128xf32>
    %8 = arith.addf %7, %3 : vector<4x8x128xf32>
    %c0_9 = arith.constant 0 : index
    %c0_10 = arith.constant 0 : index
    %c0_11 = arith.constant 0 : index
    %9 = vector.load %arg6[%c0_9, %c0_10, %c0_11] : memref<4x8x128xf32, #tpu.memory_space<vmem>>, vector<4x8x128xf32>
    tpu.vector_store %arg6[%c0_9, %c0_10, %c0_11], %8 {strides = array<i32>} : memref<4x8x128xf32, #tpu.memory_space<vmem>>, vector<4x8x128xf32>,
    %c0_12 = arith.constant 0 : index
    %c0_13 = arith.constant 0 : index
    %c0_14 = arith.constant 0 : index
    %c0_15 = arith.constant 0 : index
    %10 = vector.load %arg2[%c0_12, %c0_13, %c0_14, %c0_15] : memref<1x4x2x128xf32, #tpu.memory_space<vmem>>, vector<1x4x2x128xf32>
    %11 = vector.shape_cast %10 : vector<1x4x2x128xf32> to vector<4x2x128xf32>
    %c0_16 = arith.constant 0 : index
    %c0_17 = arith.constant 0 : index
    %c0_18 = arith.constant 0 : index
    %c0_19 = arith.constant 0 : index
    %12 = vector.load %arg3[%c0_16, %c0_17, %c0_18, %c0_19] : memref<1x1x2x128xi32, #tpu.memory_space<vmem>>, vector<1x1x2x128xi32>
    %13 = vector.shape_cast %12 : vector<1x1x2x128xi32> to vector<1x2x128xi32>
    %14 = tpu.iota {dimensions = array<i32: 0>} : vector<4x2x128xi32>
    %15 = vector.broadcast %13 : vector<1x2x128xi32> to vector<4x2x128xi32>
    %16 = arith.cmpi eq, %15, %14 : vector<4x2x128xi32>
    %c0_20 = arith.constant 0 : index
    %c0_21 = arith.constant 0 : index
    %c0_22 = arith.constant 0 : index
    %17 = vector.load %arg5[%c0_20, %c0_21, %c0_22] : memref<4x8x128xf32, #tpu.memory_space<vmem>>, vector<4x2x128xf32>
    %cst_23 = arith.constant 0.000000e+00 : f32
    %18 = vector.broadcast %cst_23 : f32 to vector<4x2x128xf32>
    %19 = arith.select %16, %11, %18 : vector<4x2x128xi1>, vector<4x2x128xf32>
    %20 = arith.addf %17, %19 : vector<4x2x128xf32>
    %c0_24 = arith.constant 0 : index
    %c0_25 = arith.constant 0 : index
    %c0_26 = arith.constant 0 : index
    %21 = vector.load %arg5[%c0_24, %c0_25, %c0_26] : memref<4x8x128xf32, #tpu.memory_space<vmem>>, vector<4x2x128xf32>
    tpu.vector_store %arg5[%c0_24, %c0_25, %c0_26], %20 {strides = array<i32>} : memref<4x8x128xf32, #tpu.memory_space<vmem>>, vector<4x2x128xf32>,
    %c0_27 = arith.constant 0 : index
    %c0_28 = arith.constant 0 : index
    %c0_29 = arith.constant 0 : index
    %22 = vector.load %arg6[%c0_27, %c0_28, %c0_29] : memref<4x8x128xf32, #tpu.memory_space<vmem>>, vector<4x2x128xf32>
    %cst_30 = arith.constant 1.000000e+00 : f32
    %23 = vector.broadcast %cst_30 : f32 to vector<4x2x128xf32>
    %24 = arith.addf %11, %23 : vector<4x2x128xf32>
    %25 = arith.select %16, %24, %11 : vector<4x2x128xi1>, vector<4x2x128xf32>
    %26 = arith.addf %22, %25 : vector<4x2x128xf32>
    %c0_31 = arith.constant 0 : index
    %c0_32 = arith.constant 0 : index
    %c0_33 = arith.constant 0 : index
    %27 = vector.load %arg6[%c0_31, %c0_32, %c0_33] : memref<4x8x128xf32, #tpu.memory_space<vmem>>, vector<4x2x128xf32>
    tpu.vector_store %arg6[%c0_31, %c0_32, %c0_33], %26 {strides = array<i32>} : memref<4x8x128xf32, #tpu.memory_space<vmem>>, vector<4x2x128xf32>,
    %c0_i32_34 = arith.constant 0 : i32
    %28 = arith.cmpi eq, %arg1, %c0_i32_34 : i32
    %29 = arith.extui %28 : i1 to i32
    %c0_i32_35 = arith.constant 0 : i32
    %30 = arith.cmpi ne, %29, %c0_i32_35 : i32
    scf.if %30 {
      %c0_36 = arith.constant 0 : index
      %c0_37 = arith.constant 0 : index
      %c0_38 = arith.constant 0 : index
      %31 = vector.load %arg5[%c0_36, %c0_37, %c0_38] : memref<4x8x128xf32, #tpu.memory_space<vmem>>, vector<4x8x128xf32>
      %cst_39 = arith.constant dense<0.000000e+00> : vector<4x128xf32>
      %32 = vector.multi_reduction <add>, %31, %cst_39 [1] : vector<4x8x128xf32> to vector<4x128xf32>
      %cst_40 = arith.constant dense<0.000000e+00> : vector<4xf32>
      %33 = vector.multi_reduction <add>, %32, %cst_40 [1] : vector<4x128xf32> to vector<4xf32>
      %34 = vector.shape_cast %33 : vector<4xf32> to vector<4x1xf32>
      %c0_41 = arith.constant 0 : index
      %c0_42 = arith.constant 0 : index
      %c0_43 = arith.constant 0 : index
      %35 = vector.load %arg6[%c0_41, %c0_42, %c0_43] : memref<4x8x128xf32, #tpu.memory_space<vmem>>, vector<4x8x128xf32>
      %cst_44 = arith.constant dense<0.000000e+00> : vector<4x128xf32>
      %36 = vector.multi_reduction <add>, %35, %cst_44 [1] : vector<4x8x128xf32> to vector<4x128xf32>
      %cst_45 = arith.constant dense<0.000000e+00> : vector<4xf32>
      %37 = vector.multi_reduction <add>, %36, %cst_45 [1] : vector<4x128xf32> to vector<4xf32>
      %38 = vector.shape_cast %37 : vector<4xf32> to vector<4x1xf32>
      %cst_46 = arith.constant 2.000000e+00 : f32
      %39 = vector.broadcast %cst_46 : f32 to vector<4x1xf32>
      %40 = arith.mulf %39, %34 : vector<4x1xf32>
      %cst_47 = arith.constant 1.000000e+00 : f32
      %41 = vector.broadcast %cst_47 : f32 to vector<4x1xf32>
      %42 = arith.addf %40, %41 : vector<4x1xf32>
      %cst_48 = arith.constant 1.000000e+00 : f32
      %43 = vector.broadcast %cst_48 : f32 to vector<4x1xf32>
      %44 = arith.addf %38, %43 : vector<4x1xf32>
      %45 = arith.divf %42, %44 : vector<4x1xf32>
      %c0_49 = arith.constant 0 : index
      %c0_50 = arith.constant 0 : index
      %c0_51 = arith.constant 0 : index
      %46 = vector.load %arg4[%c0_49, %c0_50, %c0_51] : memref<1x4x1xf32, #tpu.memory_space<vmem>>, vector<1x4x1xf32>
      %47 = vector.shape_cast %46 : vector<1x4x1xf32> to vector<4x1xf32>
      %48 = vector.shape_cast %45 : vector<4x1xf32> to vector<1x4x1xf32>
      tpu.vector_store %arg4[%c0_49, %c0_50, %c0_51], %48 {strides = array<i32>} : memref<1x4x1xf32, #tpu.memory_space<vmem>>, vector<1x4x1xf32>,
    } else {
    }
    return
  }
  func.func @transform_0(%arg0: i32, %arg1: i32) -> (i32, i32, i32, i32) {
    %c0_i32 = arith.constant 0 : i32
    %c0_i32_0 = arith.constant 0 : i32
    %c0_i32_1 = arith.constant 0 : i32
    return %arg0, %c0_i32, %arg1, %c0_i32_0 : i32, i32, i32, i32
  }
  func.func @transform_1(%arg0: i32, %arg1: i32) -> (i32, i32, i32, i32) {
    %c0_i32 = arith.constant 0 : i32
    %c0_i32_0 = arith.constant 0 : i32
    %c0_i32_1 = arith.constant 0 : i32
    return %arg0, %c0_i32, %arg1, %c0_i32_0 : i32, i32, i32, i32
  }
  func.func @transform_2(%arg0: i32, %arg1: i32) -> (i32, i32, i32) {
    %c0_i32 = arith.constant 0 : i32
    %c0_i32_0 = arith.constant 0 : i32
    %c0_i32_1 = arith.constant 0 : i32
    return %arg0, %c0_i32, %c0_i32_0 : i32, i32, i32
  }
}

</mosaic_0001>

<llo_original>
// kernel: tpu_custom_call.1
$region0: #{tpu_custom_call.1}
  #allocation0 [shape = 'u32[]', space=smem, size = 0x4, offset = 0x4, fixed_abs, tag = 'smem constant byte address 0x4 - core index']
  #allocation1 [shape = 'u32[72,128]{1,0:T(1,128)}', space=vmem, size = 0x9000, scoped, tag = 'internal scratch']
  #allocation2 [shape = 'f32[4,8,128]{2,1,0:T(8,128)}', space=vmem, size = 0x4000, scoped, tag = 'scratch operand']
  #allocation3 [shape = 'f32[4,8,128]{2,1,0:T(8,128)}', space=vmem, size = 0x4000, scoped, tag = 'scratch operand']
  %s0 = inlined_call_operand.hbm [shape: f32[2,4,2,128], index: 0, kind: input, shape index: {}]
  %s1 = inlined_call_operand.hbm [shape: s32[2,1,2,128], index: 1, kind: input, shape index: {}]
  %s2 = inlined_call_operand.vmem [shape: f32[2,4,1], index: 2, kind: output, shape index: {}]
  %s3 = sld [smem:[#allocation0]]
  $region57: #{tpu_custom_call.1} parent=0
    _
  %s5 = ssub.s32 1, %s3
  %s6 = scalar_select 0, %s5, %s3
  $region1: #{tpu_custom_call.1} parent=0
    #allocation4 [shape = 'u8[8192]{0}', space=vmem, size = 0x2000, scoped, tag = 'input window, operand 0']
    #allocation5 [shape = 's32[2]{0}', space=sflag, size = 0x8, scoped, tag = 'scoped memory for tpu_custom_call.1']
    #allocation6 [shape = 'u8[2048]{0}', space=vmem, size = 0x800, scoped, tag = 'input window, operand 1']
    #allocation7 [shape = 's32[2]{0}', space=sflag, size = 0x8, scoped, tag = 'scoped memory for tpu_custom_call.1']
    %7 = vsyncpa [#allocation5], 0
    %s8 = scalar_lea.sflag [#allocation5], 1
    %9 = vsyncpa %s8, 0
    %10 = vsyncpa [#allocation7], 0
    %s11 = scalar_lea.sflag [#allocation7], 1
    %12 = vsyncpa %s11, 0
    loop: start=0, step=1, limit=4
    $region2: #{tpu_custom_call.1} parent=1 // loop_pre_header
      _
    $region3: #{tpu_custom_call.1} parent=1 // loop_header
      %s14 = sphi 0, %s18
      %p15 = scmp.ge.s32.totalorder %s14, 4
      %s21 = sphi 0, %s33
      %s22 = sphi 0, %s29
      %s23 = sphi 0, %s21
      %s24 = sphi 0, %s22
      %s25 = sphi 0, %s23
      %s26 = sphi 0, %s24
      %s38 = sphi 0, %s40
      %s41 = sphi 0, %s38
      %s42 = sphi 0, %s41
      %s58 = sphi 0, %s42
      %s66 = sphi 0, %s68
      %s69 = sphi 0, %s66
      %s70 = sphi 0, %s69
      %s86 = sphi 0, %s70
      %s92 = sphi 0, %s94
      %s95 = sphi 0, %s92
      %s96 = sphi 0, %s95
      %s112 = sphi 0, %s96
    $region4: #{tpu_custom_call.1} parent=1 // loop_header_branch
      %17 = sbr.rel (%p15) target = $region8
    $region5: #{tpu_custom_call.1} parent=1 // loop_body
      %s19 = ssub.s32 %s14, 1
      %s20 = ssub.s32 %s14, 2
      %s27 = sadd.s32 1, %s22
      %p28 = scmp.ge.s32.totalorder %s27, 1
      %s29 = scalar_select %p28, 0, %s27
      %s30 = sadd.s32 1, %s21
      %s31 = scalar_select %p28, %s30, %s21
      %p32 = scmp.ge.s32.totalorder %s31, 2
      %s33 = scalar_select %p32, 0, %s31
      %s34 = ssub.s32 %s21, %s33
      %s35 = ssub.s32 %s22, %s29
      %s36 = sor.u32 %s34, %s35
      %p37 = scmp.eq.s32.totalorder %s36, 0
      %s39 = sadd.s32 %s38, 1
      %s40 = scalar_select %p37, %s38, %s39
      %p43 = pneg %p37
      %p44 = scmp.eq.s32.totalorder %s14, 1
      %p45 = por %p43, %p44
      %p46 = scmp.ne.s32.totalorder %s38, %s41
      %p47 = scmp.eq.s32.totalorder %s14, 0
      %p48 = por %p46, %p47
      %p49 = scmp.ne.s32.totalorder %s38, %s41
      %p50 = scmp.eq.s32.totalorder %s19, 1
      %p51 = por %p49, %p50
      %p52 = scmp.ne.s32.totalorder %s41, %s42
      %p53 = scmp.eq.s32.totalorder %s19, 0
      %p54 = por %p52, %p53
      %p55 = scmp.ne.s32.totalorder %s41, %s42
      %p56 = scmp.eq.s32.totalorder %s20, 1
      %p57 = por %p55, %p56
      %p59 = scmp.ne.s32.totalorder %s42, %s58
      %p60 = scmp.eq.s32.totalorder %s20, 0
      %p61 = por %p59, %p60
      %s62 = ssub.s32 %s21, %s33
      %s63 = ssub.s32 %s22, %s29
      %s64 = sor.u32 %s62, %s63
      %p65 = scmp.eq.s32.totalorder %s64, 0
      %s67 = sadd.s32 %s66, 1
      %s68 = scalar_select %p65, %s66, %s67
      %p71 = pneg %p65
      %p72 = scmp.eq.s32.totalorder %s14, 1
      %p73 = por %p71, %p72
      %p74 = scmp.ne.s32.totalorder %s66, %s69
      %p75 = scmp.eq.s32.totalorder %s14, 0
      %p76 = por %p74, %p75
      %p77 = scmp.ne.s32.totalorder %s66, %s69
      %p78 = scmp.eq.s32.totalorder %s19, 1
      %p79 = por %p77, %p78
      %p80 = scmp.ne.s32.totalorder %s69, %s70
      %p81 = scmp.eq.s32.totalorder %s19, 0
      %p82 = por %p80, %p81
      %p83 = scmp.ne.s32.totalorder %s69, %s70
      %p84 = scmp.eq.s32.totalorder %s20, 1
      %p85 = por %p83, %p84
      %p87 = scmp.ne.s32.totalorder %s70, %s86
      %p88 = scmp.eq.s32.totalorder %s20, 0
      %p89 = por %p87, %p88
      %s90 = ssub.s32 %s21, %s33
      %p91 = scmp.eq.s32.totalorder %s90, 0
      %s93 = sadd.s32 %s92, 1
      %s94 = scalar_select %p91, %s92, %s93
      %p97 = pneg %p91
      %p98 = scmp.eq.s32.totalorder %s14, 1
      %p99 = por %p97, %p98
      %p100 = scmp.ne.s32.totalorder %s92, %s95
      %p101 = scmp.eq.s32.totalorder %s14, 0
      %p102 = por %p100, %p101
      %p103 = scmp.ne.s32.totalorder %s92, %s95
      %p104 = scmp.eq.s32.totalorder %s19, 1
      %p105 = por %p103, %p104
      %p106 = scmp.ne.s32.totalorder %s95, %s96
      %p107 = scmp.eq.s32.totalorder %s19, 0
      %p108 = por %p106, %p107
      %p109 = scmp.ne.s32.totalorder %s95, %s96
      %p110 = scmp.eq.s32.totalorder %s20, 1
      %p111 = por %p109, %p110
      %p113 = scmp.ne.s32.totalorder %s96, %s112
      %p114 = scmp.eq.s32.totalorder %s20, 0
      %p115 = por %p113, %p114
      %p116 = scmp.le.s32.totalorder 1, %s14
      %p117 = scmp.lt.s32.totalorder %s14, 3
      %p118 = pnand %p116, %p117
      %p119 = pneg %p118
      // Predicated region
      $region9: #{tpu_custom_call.1} parent=5 // pred_check
        _
      $region10: #{tpu_custom_call.1} parent=5 // pred_check_branch
        %121 = sbr.rel (%p118) target = $region12
      $region11: #{tpu_custom_call.1} parent=5 // pred_region
        %s122 = ssub.s32 %s14, 1
      $region12: #{tpu_custom_call.1} parent=5 // pred_fallthru
        _
      %p123 = scmp.lt.s32.totalorder %s14, 2
      // Predicated region
      $region13: #{tpu_custom_call.1} parent=5 // pred_check
        %p124 = pneg %p123
      $region14: #{tpu_custom_call.1} parent=5 // pred_check_branch
        %126 = sbr.rel (%p124) target = $region16
      $region15: #{tpu_custom_call.1} parent=5 // pred_region
        // Predicated region
        $region17: #{tpu_custom_call.1} parent=15 // pred_check
          %p127 = pneg %p48
        $region18: #{tpu_custom_call.1} parent=15 // pred_check_branch
          %129 = sbr.rel (%p127) target = $region20
        $region19: #{tpu_custom_call.1} parent=15 // pred_region
          %s130 = sand.u32 %s38, 1
          %s131 = scalar_lea.sflag [#allocation5], %s130
          %s132 = sand.u32 %s38, 1
          %s133 = smul.addr %s132, 8
          %s134 = scalar_lea.vmem [#allocation4], %s133
          %136 = vsyncadd %s131, 0
          %s137 = smul.addr %s21, 4
          %s138 = sadd.s32 %s22, %s137
          %s139 = smul.addr %s138, 2
          %s140 = scalar_lea.hbm %s0, %s139
          %s141 = sshll.u32 %s140, 4
          %s142 = int_to_ptr.hbm [resolvable:$true] %s141
          %s143 = sshll.u32 %s134, 4
          %s144 = int_to_ptr.vmem [resolvable:$true] %s143
          %149 = dma.hbm_to_vmem [thread:$0]  %s142, 128, %s144, %s131, 32, 32, 2
        $region20: #{tpu_custom_call.1} parent=15 // pred_fallthru
          _
        // Predicated region
        $region21: #{tpu_custom_call.1} parent=15 // pred_check
          %p150 = pneg %p76
        $region22: #{tpu_custom_call.1} parent=15 // pred_check_branch
          %152 = sbr.rel (%p150) target = $region24
        $region23: #{tpu_custom_call.1} parent=15 // pred_region
          %s153 = sand.u32 %s66, 1
          %s154 = scalar_lea.sflag [#allocation7], %s153
          %s155 = sand.u32 %s66, 1
          %s156 = smul.addr %s155, 2
          %s157 = scalar_lea.vmem [#allocation6], %s156
          %159 = vsyncadd %s154, 0
          %s160 = sadd.s32 %s22, %s21
          %s161 = smul.addr %s160, 2
          %s162 = scalar_lea.hbm %s1, %s161
          %s164 = sshll.u32 %s162, 4
          %s165 = int_to_ptr.hbm [resolvable:$true] %s164
          %s166 = sshll.u32 %s157, 4
          %s167 = int_to_ptr.vmem [resolvable:$true] %s166
          %169 = dma.hbm_to_vmem [thread:$0]  %s165, 32, %s167, %s154
        $region24: #{tpu_custom_call.1} parent=15 // pred_fallthru
          _
      $region16: #{tpu_custom_call.1} parent=5 // pred_fallthru
        _
      %p170 = scmp.le.s32.totalorder 1, %s14
      %p171 = scmp.lt.s32.totalorder %s14, 3
      %p172 = pnand %p170, %p171
      %p173 = pneg %p172
      // Predicated region
      $region25: #{tpu_custom_call.1} parent=5 // pred_check
        _
      $region26: #{tpu_custom_call.1} parent=5 // pred_check_branch
        %175 = sbr.rel (%p172) target = $region28
      $region27: #{tpu_custom_call.1} parent=5 // pred_region
        %s176 = ssub.s32 %s14, 1
        %s177 = sand.u32 %s41, 1
        %s178 = scalar_lea.sflag [#allocation5], %s177
        %s179 = sand.u32 %s41, 1
        %s180 = smul.addr %s179, 8
        %s181 = scalar_lea.vmem [#allocation4], %s180
        // Predicated region
        $region29: #{tpu_custom_call.1} parent=27 // pred_check
          %p182 = pneg %p54
        $region30: #{tpu_custom_call.1} parent=27 // pred_check_branch
          %184 = sbr.rel (%p182) target = $region32
        $region31: #{tpu_custom_call.1} parent=27 // pred_region
          %186 = dma.done %s178, 128
        $region32: #{tpu_custom_call.1} parent=27 // pred_fallthru
          _
        %s187 = sand.u32 %s69, 1
        %s188 = scalar_lea.sflag [#allocation7], %s187
        %s189 = sand.u32 %s69, 1
        %s190 = smul.addr %s189, 2
        %s191 = scalar_lea.vmem [#allocation6], %s190
        // Predicated region
        $region33: #{tpu_custom_call.1} parent=27 // pred_check
          %p192 = pneg %p82
        $region34: #{tpu_custom_call.1} parent=27 // pred_check_branch
          %194 = sbr.rel (%p192) target = $region36
        $region35: #{tpu_custom_call.1} parent=27 // pred_region
          %196 = dma.done %s188, 32
        $region36: #{tpu_custom_call.1} parent=27 // pred_fallthru
          _
        %s197 = sand.u32 %s41, 1
        %s198 = scalar_lea.sflag [#allocation5], %s197
        %s199 = sand.u32 %s41, 1
        %s200 = smul.addr %s199, 8
        %s201 = scalar_lea.vmem [#allocation4], %s200
        %p202 = pneg %p54
        %p203 = pneg %p51
        %s204 = sand.u32 %s69, 1
        %s205 = scalar_lea.sflag [#allocation7], %s204
        %s206 = sand.u32 %s69, 1
        %s207 = smul.addr %s206, 2
        %s208 = scalar_lea.vmem [#allocation6], %s207
        %p209 = pneg %p82
        %p210 = pneg %p79
        %p211 = pneg %p108
        %p212 = pneg %p105
        %p213 = scmp.lt.s32.totalorder %s23, 1
        %s214 = scalar_select %p213, %s23, 1
        %s215 = smul.addr %s214, 4
        %s216 = scalar_lea.vmem %s2, %s215
        %p217 = scmp.lt.s32.totalorder %s23, 1
        %s218 = scalar_select %p217, %s23, 1
        %s219 = smul.addr %s218, 4
        %s220 = scalar_lea.vmem %s2, %s219
        %p221 = scmp.eq.s32.totalorder %s24, 0
        // Predicated region
        $region37: #{tpu_custom_call.1} parent=27 // pred_check
          %p222 = pneg %p221
        $region38: #{tpu_custom_call.1} parent=27 // pred_check_branch
          %224 = sbr.rel (%p222) target = $region40
        $region39: #{tpu_custom_call.1} parent=27 // pred_region
          %225 = vst [vmem:[#allocation2] sm:$0xff] 0.0
          %226 = vst [vmem:[#allocation2 + $0x8] sm:$0xff] 0.0
          %227 = vst [vmem:[#allocation2 + $0x10] sm:$0xff] 0.0
          %228 = vst [vmem:[#allocation2 + $0x18] sm:$0xff] 0.0
          %229 = vst [vmem:[#allocation3] sm:$0xff] 0.0
          %230 = vst [vmem:[#allocation3 + $0x8] sm:$0xff] 0.0
          %231 = vst [vmem:[#allocation3 + $0x10] sm:$0xff] 0.0
          %232 = vst [vmem:[#allocation3 + $0x18] sm:$0xff] 0.0
        $region40: #{tpu_custom_call.1} parent=27 // pred_fallthru
          _
        %v233 = vld [vmem:[#allocation2] sm:$0xff]
        %v234 = vld [vmem:[#allocation2 + $0x8] sm:$0xff]
        %v235 = vld [vmem:[#allocation2 + $0x10] sm:$0xff]
        %v236 = vld [vmem:[#allocation2 + $0x18] sm:$0xff]
        %v237 = vadd.f32 %v233, 0.0
        %v238 = vadd.f32 %v234, 0.0
        %v239 = vadd.f32 %v235, 0.0
        %v240 = vadd.f32 %v236, 0.0
        %241 = vst [vmem:[#allocation2] sm:$0xff] %v237
        %242 = vst [vmem:[#allocation2 + $0x8] sm:$0xff] %v238
        %243 = vst [vmem:[#allocation2 + $0x10] sm:$0xff] %v239
        %244 = vst [vmem:[#allocation2 + $0x18] sm:$0xff] %v240
        %v245 = vld [vmem:[#allocation3] sm:$0xff]
        %v246 = vld [vmem:[#allocation3 + $0x8] sm:$0xff]
        %v247 = vld [vmem:[#allocation3 + $0x10] sm:$0xff]
        %v248 = vld [vmem:[#allocation3 + $0x18] sm:$0xff]
        %v249 = vadd.f32 %v245, 0.0
        %v250 = vadd.f32 %v246, 0.0
        %v251 = vadd.f32 %v247, 0.0
        %v252 = vadd.f32 %v248, 0.0
        %253 = vst [vmem:[#allocation3] sm:$0xff] %v249
        %254 = vst [vmem:[#allocation3 + $0x8] sm:$0xff] %v250
        %255 = vst [vmem:[#allocation3 + $0x10] sm:$0xff] %v251
        %256 = vst [vmem:[#allocation3 + $0x18] sm:$0xff] %v252
        %v257 = vld [vmem:[%s181] sm:$0x3]
        %v258 = vld [vmem:[%s181 + $0x2] sm:$0x3]
        %v259 = vld [vmem:[%s181 + $0x4] sm:$0x3]
        %v260 = vld [vmem:[%s181 + $0x6] sm:$0x3]
        %v261 = vld [vmem:[%s191] sm:$0x3]
        %vm262 = vcmp.eq.s32.totalorder %v261, 0
        %vm263 = vcmp.eq.s32.totalorder %v261, 1
        %vm264 = vcmp.eq.s32.totalorder %v261, 2
        %vm265 = vcmp.eq.s32.totalorder %v261, 3
        %v266 = vld [vmem:[#allocation2] sm:$0x3]
        %v267 = vld [vmem:[#allocation2 + $0x8] sm:$0x3]
        %v268 = vld [vmem:[#allocation2 + $0x10] sm:$0x3]
        %v269 = vld [vmem:[#allocation2 + $0x18] sm:$0x3]
        %v270 = vsel %vm262, %v257, 0.0
        %v271 = vsel %vm263, %v258, 0.0
        %v272 = vsel %vm264, %v259, 0.0
        %v273 = vsel %vm265, %v260, 0.0
        %v274 = vadd.f32 %v266, %v270
        %v275 = vadd.f32 %v267, %v271
        %v276 = vadd.f32 %v268, %v272
        %v277 = vadd.f32 %v269, %v273
        %278 = vst [vmem:[#allocation2] sm:$0x3] %v274
        %279 = vst [vmem:[#allocation2 + $0x8] sm:$0x3] %v275
        %280 = vst [vmem:[#allocation2 + $0x10] sm:$0x3] %v276
        %281 = vst [vmem:[#allocation2 + $0x18] sm:$0x3] %v277
        %v282 = vld [vmem:[#allocation3] sm:$0x3]
        %v283 = vld [vmem:[#allocation3 + $0x8] sm:$0x3]
        %v284 = vld [vmem:[#allocation3 + $0x10] sm:$0x3]
        %v285 = vld [vmem:[#allocation3 + $0x18] sm:$0x3]
        %v286 = vadd.f32 %v257, 1.0
        %v287 = vadd.f32 %v258, 1.0
        %v288 = vadd.f32 %v259, 1.0
        %v289 = vadd.f32 %v260, 1.0
        %v290 = vsel %vm262, %v286, %v257
        %v291 = vsel %vm263, %v287, %v258
        %v292 = vsel %vm264, %v288, %v259
        %v293 = vsel %vm265, %v289, %v260
        %v294 = vadd.f32 %v282, %v290
        %v295 = vadd.f32 %v283, %v291
        %v296 = vadd.f32 %v284, %v292
        %v297 = vadd.f32 %v285, %v293
        %298 = vst [vmem:[#allocation3] sm:$0x3] %v294
        %299 = vst [vmem:[#allocation3 + $0x8] sm:$0x3] %v295
        %300 = vst [vmem:[#allocation3 + $0x10] sm:$0x3] %v296
        %301 = vst [vmem:[#allocation3 + $0x18] sm:$0x3] %v297
        // Predicated region
        $region41: #{tpu_custom_call.1} parent=27 // pred_check
          %p302 = pneg %p221
        $region42: #{tpu_custom_call.1} parent=27 // pred_check_branch
          %304 = sbr.rel (%p302) target = $region44
        $region43: #{tpu_custom_call.1} parent=27 // pred_region
          %v305 = vld [vmem:[#allocation2] sm:$0xff]
          %v306 = vld [vmem:[#allocation2 + $0x8] sm:$0xff]
          %v307 = vld [vmem:[#allocation2 + $0x10] sm:$0xff]
          %v308 = vld [vmem:[#allocation2 + $0x18] sm:$0xff]
          %v309 = vrot.slane %v305, 4
          %v310 = vadd.f32 %v305, %v309
          %v311 = vrot.slane %v310, 2
          %v312 = vadd.f32 %v310, %v311
          %v313 = vrot.slane %v312, 1
          %v314 = vadd.f32 %v312, %v313
          %v315 = vrot.slane %v306, 4
          %v316 = vadd.f32 %v306, %v315
          %v317 = vrot.slane %v316, 2
          %v318 = vadd.f32 %v316, %v317
          %v319 = vrot.slane %v318, 1
          %v320 = vadd.f32 %v318, %v319
          %v321 = vrot.slane %v307, 4
          %v322 = vadd.f32 %v307, %v321
          %v323 = vrot.slane %v322, 2
          %v324 = vadd.f32 %v322, %v323
          %v325 = vrot.slane %v324, 1
          %v326 = vadd.f32 %v324, %v325
          %v327 = vrot.slane %v308, 4
          %v328 = vadd.f32 %v308, %v327
          %v329 = vrot.slane %v328, 2
          %v330 = vadd.f32 %v328, %v329
          %v331 = vrot.slane %v330, 1
          %v332 = vadd.f32 %v330, %v331
          %vm337 = vcmask 1041409
          %v338 = vsel %vm337, %v320, %v314
          %vm339 = vcmask 1042434
          %v340 = vsel %vm339, %v326, %v338
          %vm341 = vcmask 1043459
          %v342 = vsel %vm341, %v332, %v340
          %vm344 = vcmask 1043456
          %v345 = vsel %vm344, %v342, 0.0
          %346 = vadd.xlane.f32.xlu0 %v345
          %v347 = vpop.xlane.xlu0 %346
          %v348 = vld [vmem:[#allocation3] sm:$0xff]
          %v349 = vld [vmem:[#allocation3 + $0x8] sm:$0xff]
          %v350 = vld [vmem:[#allocation3 + $0x10] sm:$0xff]
          %v351 = vld [vmem:[#allocation3 + $0x18] sm:$0xff]
          %v352 = vrot.slane %v348, 4
          %v353 = vadd.f32 %v348, %v352
          %v354 = vrot.slane %v353, 2
          %v355 = vadd.f32 %v353, %v354
          %v356 = vrot.slane %v355, 1
          %v357 = vadd.f32 %v355, %v356
          %v358 = vrot.slane %v349, 4
          %v359 = vadd.f32 %v349, %v358
          %v360 = vrot.slane %v359, 2
          %v361 = vadd.f32 %v359, %v360
          %v362 = vrot.slane %v361, 1
          %v363 = vadd.f32 %v361, %v362
          %v364 = vrot.slane %v350, 4
          %v365 = vadd.f32 %v350, %v364
          %v366 = vrot.slane %v365, 2
          %v367 = vadd.f32 %v365, %v366
          %v368 = vrot.slane %v367, 1
          %v369 = vadd.f32 %v367, %v368
          %v370 = vrot.slane %v351, 4
          %v371 = vadd.f32 %v351, %v370
          %v372 = vrot.slane %v371, 2
          %v373 = vadd.f32 %v371, %v372
          %v374 = vrot.slane %v373, 1
          %v375 = vadd.f32 %v373, %v374
          %v380 = vsel %vm337, %v363, %v357
          %v381 = vsel %vm339, %v369, %v380
          %v382 = vsel %vm341, %v375, %v381
          %v384 = vsel %vm344, %v382, 0.0
          %385 = vadd.xlane.f32.xlu0 %v384
          %v386 = vpop.xlane.xlu0 %385
          %v387 = vmul.f32 %v347, 2.0
          %v388 = vadd.f32 %v387, 1.0
          %v389 = vadd.f32 %v386, 1.0
          %v390 = vrcp.pop %v389
          %v391 = vmul.f32 %v389, %v390
          %v392 = vsub.f32 1.0, %v391
          %v393 = vmul.f32 %v390, %v392
          %v394 = vadd.f32 %v390, %v393
          %vm395 = vweird.f32 %v389
          %vm396 = vweird.f32 %v390
          %vm397 = vmor %vm395, %vm396
          %v398 = vsel %vm397, %v390, %v394
          %v399 = vand.u32 2147483647, %v389
          %vm400 = vcmp.eq.f32.partialorder %v399, 8.507059e+37
          %v401 = vand.u32 %v389, 2147483648
          %v402 = vor.u32 1.1754944e-38, %v401
          %v403 = vsel %vm400, %v402, %v398
          %v404 = vmul.f32 %v388, %v403
          %vm405 = vcmask 3072
          %406 = vst.msk [vmem:[%s220] sm:$0xf] %vm405, %v404
        $region44: #{tpu_custom_call.1} parent=27 // pred_fallthru
          _
        %p407 = scmp.lt.s32.totalorder %s23, 1
        %s408 = scalar_select %p407, %s23, 1
        %s409 = smul.addr %s408, 4
        %s410 = scalar_lea.vmem %s2, %s409
        // Predicated region
        $region45: #{tpu_custom_call.1} parent=27 // pred_check
          %p411 = pneg %p105
        $region46: #{tpu_custom_call.1} parent=27 // pred_check_branch
          %413 = sbr.rel (%p411) target = $region48
        $region47: #{tpu_custom_call.1} parent=27 // pred_region
          _
        $region48: #{tpu_custom_call.1} parent=27 // pred_fallthru
          _
      $region28: #{tpu_custom_call.1} parent=5 // pred_fallthru
        _
      %p414 = scmp.le.s32.totalorder 2, %s14
      // Predicated region
      $region49: #{tpu_custom_call.1} parent=5 // pred_check
        %p415 = pneg %p414
      $region50: #{tpu_custom_call.1} parent=5 // pred_check_branch
        %417 = sbr.rel (%p415) target = $region52
      $region51: #{tpu_custom_call.1} parent=5 // pred_region
        %s418 = ssub.s32 %s14, 2
        // Predicated region
        $region53: #{tpu_custom_call.1} parent=51 // pred_check
          %p419 = pneg %p111
        $region54: #{tpu_custom_call.1} parent=51 // pred_check_branch
          %421 = sbr.rel (%p419) target = $region56
        $region55: #{tpu_custom_call.1} parent=51 // pred_region
          %p422 = scmp.lt.s32.totalorder %s25, 1
          %s423 = scalar_select %p422, %s25, 1
          %s424 = smul.addr %s423, 4
          %s425 = scalar_lea.vmem %s2, %s424
        $region56: #{tpu_custom_call.1} parent=51 // pred_fallthru
          _
      $region52: #{tpu_custom_call.1} parent=5 // pred_fallthru
        _
    $region6: #{tpu_custom_call.1} parent=1 // loop_footer
      %s18 = sadd.s32 1, %s14
    $region7: #{tpu_custom_call.1} parent=1 // loop_footer_branch
      %13 = sbr.rel target = $region3
    $region8: #{tpu_custom_call.1} parent=1 // loop_exit
      _
    %426 = vsyncpa [#allocation5], 1
    %s427 = scalar_lea.sflag [#allocation5], 1
    %428 = vsyncpa %s427, 1
    %429 = vsyncpa [#allocation7], 1
    %s430 = scalar_lea.sflag [#allocation7], 1
    %431 = vsyncpa %s430, 1

</llo_original>
